<compile_context>
chip_gen: v7x
topology: tpu7x:2x2x1
jax: 0.10.0
libtpu: 0.0.40
codegen_flags: <defaults>
</compile_context>

<pallas_src>
import functools

import jax
import jax.numpy as jnp
from jax.experimental import pallas as pl
from jax.experimental.pallas import tpu as pltpu


# ------------------------- one-time parameter prep ------------------------- #
def prep_fire_params(params, W, compute_dtype=jnp.float32):
    """Hoist all weight transposes/reshapes out of the forward pass.

    Returns (weights, meta) where weights holds:
      wsq_bd : (W*Cin, W*Csq)      block-diagonal squeeze weight (per-row GEMM)
      bsq_row: (1, W*Csq)          squeeze bias tiled across the row
      wband  : (3*W*Csq, W*Nc)     banded 3x3 weights, ky-major along K, with the
                                   expand1x1 weight folded into the center tap and
                                   horizontal (W) padding folded into the band;
                                   output columns are [expand1x1 | expand3x3].
      bex_row: (1, W*Nc)           [b1 | b3] tiled across the row
    and meta is a dict of plain Python ints (safe inside jit).
    """
    wsq = jnp.asarray(params["squeeze_w"], compute_dtype)      # (Csq, Cin, 1, 1) OIHW
    bsq = jnp.asarray(params["squeeze_b"], jnp.float32)        # (Csq,)
    w1 = jnp.asarray(params["expand1x1_w"], compute_dtype)     # (E1, Csq, 1, 1)
    b1 = jnp.asarray(params["expand1x1_b"], jnp.float32)       # (E1,)
    w3 = jnp.asarray(params["expand3x3_w"], compute_dtype)     # (E3, Csq, 3, 3)
    b3 = jnp.asarray(params["expand3x3_b"], jnp.float32)       # (E3,)

    Csq, Cin = int(wsq.shape[0]), int(wsq.shape[1])
    E1, E3 = int(w1.shape[0]), int(w3.shape[0])
    Nc = E1 + E3

    # squeeze 1x1 conv -> block-diagonal GEMM over full image rows (channels fastest).
    wsq_2d = wsq[:, :, 0, 0].T                                 # (Cin, Csq)
    eye_w = jnp.eye(W, dtype=compute_dtype)
    wsq_bd = jnp.einsum("pq,cs->pcqs", eye_w, wsq_2d).reshape(W * Cin, W * Csq)
    bsq_row = jnp.tile(bsq, W).reshape(1, W * Csq)

    # Fused expand taps (ky, kx, Csq, Nc): cols [0:E1] = expand1x1 (center tap only),
    # cols [E1:] = expand3x3.
    taps = jnp.zeros((3, 3, Csq, Nc), compute_dtype)
    taps = taps.at[:, :, :, E1:].set(jnp.transpose(w3, (2, 3, 1, 0)))   # (ky,kx,c,E3)
    taps = taps.at[1, 1, :, :E1].set(w1[:, :, 0, 0].T)                  # (c,E1)

    # Banded (Toeplitz-in-W) weight per ky tap with horizontal padding folded in:
    # output pixel x reads unpadded pixel x + kx - 1 (zero outside [0, W)).
    bands = []
    for ky in range(3):
        band = jnp.zeros((W * Csq, W * Nc), compute_dtype)
        for kx in range(3):
            shift = jnp.eye(W, W, k=1 - kx, dtype=compute_dtype)        # [x+kx-1, x] = 1
            band = band + jnp.einsum("pq,cn->pcqn", shift,
                                     taps[ky, kx]).reshape(W * Csq, W * Nc)
        bands.append(band)
    wband = jnp.concatenate(bands, axis=0)                              # (3*W*Csq, W*Nc)
    bex_row = jnp.tile(jnp.concatenate([b1, b3]), W).reshape(1, W * Nc)

    weights = {"wsq_bd": wsq_bd, "bsq_row": bsq_row, "wband": wband, "bex_row": bex_row}
    meta = {"Cin": Cin, "Csq": Csq, "E1": E1, "E3": E3, "W": W}
    return weights, meta


# ------------------------------ Pallas kernel ------------------------------ #
def _make_fire_kernel(Bt, H, W, Csq, Nc):
    M = Bt * H
    WCsq = W * Csq

    def kernel(x_ref, wsq_ref, bsq_ref, wband_ref, bex_ref, o_ref):
        x = x_ref[...]                                            # (M, W*Cin), lane-dense rows

        # --- squeeze 1x1 conv + bias + ReLU: one block-diagonal GEMM ---
        s = jnp.dot(x, wsq_ref[...], preferred_element_type=jnp.float32)
        s = jnp.maximum(s + bsq_ref[...], 0.0).astype(x.dtype)    # (M, W*Csq)

        # --- vertical 3x3 taps: rows shifted by +/-1, zero at image borders ---
        zrow = jnp.zeros((1, WCsq), s.dtype)
        s_up = jnp.concatenate([zrow, s[:-1, :]], axis=0)         # row h holds s[h-1]
        s_dn = jnp.concatenate([s[1:, :], zrow], axis=0)          # row h holds s[h+1]
        if Bt > 1:
            # zero the shifts across image boundaries inside this multi-image block
            r = jax.lax.broadcasted_iota(jnp.int32, (M, WCsq), 0) % H
            s_up = jnp.where(r > 0, s_up, jnp.zeros_like(s_up))
            s_dn = jnp.where(r < H - 1, s_dn, jnp.zeros_like(s_dn))
        lhs = jnp.concatenate([s_up, s, s_dn], axis=1)            # (M, 3*W*Csq)

        # --- fused expand1x1 + expand3x3 + bias + ReLU + channel concat: one GEMM ---
        acc = jnp.dot(lhs, wband_ref[...], preferred_element_type=jnp.float32)
        o_ref[...] = jnp.maximum(acc + bex_ref[...], 0.0).astype(o_ref.dtype)

    return kernel


# ------------------------------ Fire forward ------------------------------- #
def _pick_block_batch(B, H, target_rows=256):
    """Largest Bt dividing B with Bt*H <= target_rows; keep >= 2 grid steps if B allows."""
    best = 1
    for bt in range(1, B + 1):
        if B % bt == 0 and bt * H <= target_rows:
            best = bt
    if B // best < 2 and B >= 2:
        for bt in range(best - 1, 0, -1):
            if B % bt == 0 and B // bt >= 2:
                return bt
    return best


def fire_forward(x_nchw, weights, meta, out_dtype=jnp.float32, block_batch=None):
    """Fire.forward with the PyTorch NCHW interface; one fused Pallas call."""
    B, Cin, H, W = x_nchw.shape                       # Python ints (static under jit)
    assert Cin == meta["Cin"] and W == meta["W"]
    Csq, E1, E3 = meta["Csq"], meta["E1"], meta["E3"]
    Nc = E1 + E3
    cdt = weights["wsq_bd"].dtype

    Bt = _pick_block_batch(B, H) if block_batch is None else block_batch
    assert B % Bt == 0
    M = Bt * H

    # NCHW -> NHWC -> lane-dense rows (B*H, W*Cin) with channels fastest per pixel.
    # (Keep activations in this layout across chained Fire modules when possible.)
    x_rows = jnp.transpose(x_nchw, (0, 2, 3, 1)).reshape(B * H, W * Cin).astype(cdt)

    kernel = _make_fire_kernel(Bt, H, W, Csq, Nc)
    out_rows = pl.pallas_call(
        kernel,
        out_shape=jax.ShapeDtypeStruct((B * H, W * Nc), out_dtype),
        grid=(B // Bt,),                               # Bt images per grid step
        in_specs=[
            pl.BlockSpec((M, W * Cin), lambda i: (i, 0)),            # streamed activations
            pl.BlockSpec((W * Cin, W * Csq), lambda i: (0, 0)),      # resident weights
            pl.BlockSpec((1, W * Csq), lambda i: (0, 0)),
            pl.BlockSpec((3 * W * Csq, W * Nc), lambda i: (0, 0)),
            pl.BlockSpec((1, W * Nc), lambda i: (0, 0)),
        ],
        out_specs=pl.BlockSpec((M, W * Nc), lambda i: (i, 0)),
        compiler_params=pltpu.CompilerParams(
            dimension_semantics=("parallel",),         # shard steps across TCs (v7x megacore)
            vmem_limit_bytes=32 * 1024 * 1024),
    )(x_rows, weights["wsq_bd"], weights["bsq_row"], weights["wband"], weights["bex_row"])

    # (B*H, W*Nc) -> NCHW; channel order [expand1x1 | expand3x3] == torch.cat dim=1
    return jnp.transpose(out_rows.reshape(B, H, W, Nc), (0, 3, 1, 2))


# --------------------------- Pure-JAX reference ----------------------------- #
def fire_reference(x, params):
    def conv(x, w, b, pad):
        y = jax.lax.conv_general_dilated(
            x, w, window_strides=(1, 1), padding=[(pad, pad), (pad, pad)],
            dimension_numbers=("NCHW", "OIHW", "NCHW"))
        return jax.nn.relu(y + b[None, :, None, None])

    s = conv(x, params["squeeze_w"], params["squeeze_b"], 0)
    e1 = conv(s, params["expand1x1_w"], params["expand1x1_b"], 0)
    e3 = conv(s, params["expand3x3_w"], params["expand3x3_b"], 1)
    return jnp.concatenate([e1, e3], axis=1)


# ---------------------------------- main ------------------------------------ #
if __name__ == "__main__":
    # Fire(inplanes=4, squeeze_planes=8, expand1x1_planes=16, expand3x3_planes=16)
    B, Cin, H, W = 2, 4, 16, 16
    Csq, E1, E3 = 8, 16, 16

    key = jax.random.PRNGKey(0)
    ks = jax.random.split(key, 7)
    x = jax.random.normal(ks[0], (B, Cin, H, W), dtype=jnp.float32)
    params = {
        "squeeze_w":   0.1 * jax.random.normal(ks[1], (Csq, Cin, 1, 1), jnp.float32),
        "squeeze_b":   0.1 * jax.random.normal(ks[2], (Csq,), jnp.float32),
        "expand1x1_w": 0.1 * jax.random.normal(ks[3], (E1, Csq, 1, 1), jnp.float32),
        "expand1x1_b": 0.1 * jax.random.normal(ks[4], (E1,), jnp.float32),
        "expand3x3_w": 0.1 * jax.random.normal(ks[5], (E3, Csq, 3, 3), jnp.float32),
        "expand3x3_b": 0.1 * jax.random.normal(ks[6], (E3,), jnp.float32),
    }

    # One-time host-side weight prep (NOT jitted, so meta stays plain Python ints).
    # Use compute_dtype=jnp.bfloat16 on v6e/v7x in prod; f32 here for a tight check.
    weights, meta = prep_fire_params(params, W=W)
    weights = jax.tree.map(jax.block_until_ready, weights)

    fwd = jax.jit(functools.partial(fire_forward, weights=weights, meta=meta))
    out = jax.block_until_ready(fwd(x))

    ref = fire_reference(x, params)
    assert out.shape == (B, E1 + E3, H, W), out.shape
    assert jnp.allclose(out, ref, atol=2e-4, rtol=2e-4), "mismatch vs reference conv"

    print("KERNEL_OK")
</pallas_src>

<mosaic_0001>
module attributes {stable_mosaic.version = 11 : i64} {
  func.func @kernel(%arg0: i32, %arg1: memref<16x64xf32, #tpu.memory_space<vmem>>, %arg2: memref<64x128xf32, #tpu.memory_space<vmem>>, %arg3: memref<1x128xf32, #tpu.memory_space<vmem>>, %arg4: memref<384x512xf32, #tpu.memory_space<vmem>>, %arg5: memref<1x512xf32, #tpu.memory_space<vmem>>, %arg6: memref<16x512xf32, #tpu.memory_space<vmem>>) attributes {dimension_semantics = [#tpu.dimension_semantics<parallel>], iteration_bounds = array<i64: 2>, scalar_prefetch = 0 : i64, scratch_operands = 0 : i64, tpu.core_type = #tpu.core_type<tc>, window_params = [{transform_indices = @transform_0, window_bounds = array<i64: 16, 64>}, {pipeline_mode = #tpu.pipeline_mode<synchronous>, transform_indices = @transform_1, window_bounds = array<i64: 64, 128>}, {pipeline_mode = #tpu.pipeline_mode<synchronous>, transform_indices = @transform_2, window_bounds = array<i64: 1, 128>}, {pipeline_mode = #tpu.pipeline_mode<synchronous>, transform_indices = @transform_3, window_bounds = array<i64: 384, 512>}, {pipeline_mode = #tpu.pipeline_mode<synchronous>, transform_indices = @transform_4, window_bounds = array<i64: 1, 512>}, {transform_indices = @transform_5, window_bounds = array<i64: 16, 512>}]} {
    %c0 = arith.constant 0 : index
    %c0_0 = arith.constant 0 : index
    %0 = vector.load %arg1[%c0, %c0_0] : memref<16x64xf32, #tpu.memory_space<vmem>>, vector<16x64xf32>
    %c0_1 = arith.constant 0 : index
    %c0_2 = arith.constant 0 : index
    %1 = vector.load %arg2[%c0_1, %c0_2] : memref<64x128xf32, #tpu.memory_space<vmem>>, vector<64x128xf32>
    %cst = arith.constant dense<0.000000e+00> : vector<16x128xf32>
    %2 = tpu.matmul %0, %1, %cst {dimension_numbers = #tpu.dot_dimension_numbers<[1], [0], [0], [1], [0, 0, 1, 1], [], []>} : vector<16x64xf32>, vector<64x128xf32>, vector<16x128xf32> -> vector<16x128xf32>
    %c0_3 = arith.constant 0 : index
    %c0_4 = arith.constant 0 : index
    %3 = vector.load %arg3[%c0_3, %c0_4] : memref<1x128xf32, #tpu.memory_space<vmem>>, vector<1x128xf32>
    %4 = vector.broadcast %3 : vector<1x128xf32> to vector<16x128xf32>
    %5 = arith.addf %2, %4 : vector<16x128xf32>
    %cst_5 = arith.constant 0.000000e+00 : f32
    %6 = vector.broadcast %cst_5 : f32 to vector<16x128xf32>
    %7 = arith.maximumf %5, %6 : vector<16x128xf32>
    %cst_6 = arith.constant 0.000000e+00 : f32
    %8 = vector.broadcast %cst_6 : f32 to vector<1x128xf32>
    %9 = vector.extract_strided_slice %7 {offsets = [0, 0], sizes = [15, 128], strides = [1, 1]} : vector<16x128xf32> to vector<15x128xf32>
    %10 = tpu.concatenate %8, %9 in 0 : vector<1x128xf32>, vector<15x128xf32> -> vector<16x128xf32>
    %11 = vector.extract_strided_slice %7 {offsets = [1, 0], sizes = [15, 128], strides = [1, 1]} : vector<16x128xf32> to vector<15x128xf32>
    %12 = tpu.concatenate %11, %8 in 0 : vector<15x128xf32>, vector<1x128xf32> -> vector<16x128xf32>
    %13 = tpu.concatenate %10, %7, %12 in 1 : vector<16x128xf32>, vector<16x128xf32>, vector<16x128xf32> -> vector<16x384xf32>
    %c0_7 = arith.constant 0 : index
    %c0_8 = arith.constant 0 : index
    %14 = vector.load %arg4[%c0_7, %c0_8] : memref<384x512xf32, #tpu.memory_space<vmem>>, vector<384x512xf32>
    %cst_9 = arith.constant dense<0.000000e+00> : vector<16x512xf32>
    %15 = tpu.matmul %13, %14, %cst_9 {dimension_numbers = #tpu.dot_dimension_numbers<[1], [0], [0], [1], [0, 0, 1, 1], [], []>} : vector<16x384xf32>, vector<384x512xf32>, vector<16x512xf32> -> vector<16x512xf32>
    %c0_10 = arith.constant 0 : index
    %c0_11 = arith.constant 0 : index
    %16 = vector.load %arg5[%c0_10, %c0_11] : memref<1x512xf32, #tpu.memory_space<vmem>>, vector<1x512xf32>
    %17 = vector.broadcast %16 : vector<1x512xf32> to vector<16x512xf32>
    %18 = arith.addf %15, %17 : vector<16x512xf32>
    %cst_12 = arith.constant 0.000000e+00 : f32
    %19 = vector.broadcast %cst_12 : f32 to vector<16x512xf32>
    %20 = arith.maximumf %18, %19 : vector<16x512xf32>
    %c0_13 = arith.constant 0 : index
    %c0_14 = arith.constant 0 : index
    %21 = vector.load %arg6[%c0_13, %c0_14] : memref<16x512xf32, #tpu.memory_space<vmem>>, vector<16x512xf32>
    tpu.vector_store %arg6[%c0_13, %c0_14], %20 {strides = array<i32>} : memref<16x512xf32, #tpu.memory_space<vmem>>, vector<16x512xf32>,
    return
  }
  func.func @transform_0(%arg0: i32) -> (i32, i32) {
    %c0_i32 = arith.constant 0 : i32
    %c0_i32_0 = arith.constant 0 : i32
    return %arg0, %c0_i32 : i32, i32
  }
  func.func @transform_1(%arg0: i32) -> (i32, i32) {
    %c0_i32 = arith.constant 0 : i32
    %c0_i32_0 = arith.constant 0 : i32
    %c0_i32_1 = arith.constant 0 : i32
    return %c0_i32, %c0_i32_0 : i32, i32
  }
  func.func @transform_2(%arg0: i32) -> (i32, i32) {
    %c0_i32 = arith.constant 0 : i32
    %c0_i32_0 = arith.constant 0 : i32
    %c0_i32_1 = arith.constant 0 : i32
    return %c0_i32, %c0_i32_0 : i32, i32
  }
  func.func @transform_3(%arg0: i32) -> (i32, i32) {
    %c0_i32 = arith.constant 0 : i32
    %c0_i32_0 = arith.constant 0 : i32
    %c0_i32_1 = arith.constant 0 : i32
    return %c0_i32, %c0_i32_0 : i32, i32
  }
  func.func @transform_4(%arg0: i32) -> (i32, i32) {
    %c0_i32 = arith.constant 0 : i32
    %c0_i32_0 = arith.constant 0 : i32
    %c0_i32_1 = arith.constant 0 : i32
    return %c0_i32, %c0_i32_0 : i32, i32
  }
  func.func @transform_5(%arg0: i32) -> (i32, i32) {
    %c0_i32 = arith.constant 0 : i32
    %c0_i32_0 = arith.constant 0 : i32
    return %arg0, %c0_i32 : i32, i32
  }
}

</mosaic_0001>

<llo_original>
// kernel: fire_forward.1
$region0: #{fire_forward.1}
  #allocation0 [shape = 'u32[]', space=smem, size = 0x4, offset = 0x4, fixed_abs, tag = 'smem constant byte address 0x4 - core index']
  #allocation1 [shape = 'u32[144,128]{1,0:T(1,128)}', space=vmem, size = 0x12000, scoped, tag = 'internal scratch']
  %s0 = inlined_call_operand.vmem [shape: f32[32,64], index: 0, kind: input, shape index: {}]
  %s1 = inlined_call_operand.vmem [shape: f32[64,128], index: 1, kind: input, shape index: {}]
  %s2 = inlined_call_operand.vmem [shape: f32[1,128], index: 2, kind: input, shape index: {}]
  %s3 = inlined_call_operand.hbm [shape: f32[384,512], index: 3, kind: input, shape index: {}]
  %s4 = inlined_call_operand.vmem [shape: f32[1,512], index: 4, kind: input, shape index: {}]
  %s5 = inlined_call_operand.vmem [shape: f32[32,512], index: 5, kind: output, shape index: {}]
  %s6 = sld [smem:[#allocation0]]
  $region57: #{fire_forward.1} parent=0
    _
  %s8 = ssub.s32 1, %s6
  %s9 = scalar_select 0, %s8, %s6
  $region1: #{fire_forward.1} parent=0
    #allocation2 [shape = 'u8[786432]{0}', space=vmem, size = 0xc0000, scoped, tag = 'input window, operand 3, single buffered']
    #allocation3 [shape = 's32[2]{0}', space=sflag, size = 0x8, scoped, tag = 'scoped memory for fire_forward.1']
    %10 = vsyncpa [#allocation3], 0
    loop: start=0, step=1, limit=4
    $region2: #{fire_forward.1} parent=1 // loop_pre_header
      _
    $region3: #{fire_forward.1} parent=1 // loop_header
      %s12 = sphi 0, %s16
      %p13 = scmp.ge.s32.totalorder %s12, 4
      %s22 = sphi 0, %s24
      %s25 = sphi 0, %s22
      %s26 = sphi 0, %s25
      %s42 = sphi 0, %s26
      %s46 = sphi 0, %s46
      %s48 = sphi 0, %s46
      %s49 = sphi 0, %s48
      %s63 = sphi 0, %s49
      %s67 = sphi 0, %s67
      %s69 = sphi 0, %s67
      %s70 = sphi 0, %s69
      %s84 = sphi 0, %s70
      %s88 = sphi 0, %s88
      %s90 = sphi 0, %s88
      %s91 = sphi 0, %s90
      %s105 = sphi 0, %s91
      %s109 = sphi 0, %s109
      %s111 = sphi 0, %s109
      %s112 = sphi 0, %s111
      %s126 = sphi 0, %s112
      %s132 = sphi 0, %s134
      %s135 = sphi 0, %s132
      %s136 = sphi 0, %s135
      %s152 = sphi 0, %s136
    $region4: #{fire_forward.1} parent=1 // loop_header_branch
      %15 = sbr.rel (%p13) target = $region8
    $region5: #{fire_forward.1} parent=1 // loop_body
      %s17 = ssub.s32 %s12, 1
      %s18 = ssub.s32 %s12, 2
      %s19 = sadd.s32 %s12, 1
      %s20 = ssub.s32 %s12, %s19
      %p21 = scmp.eq.s32.totalorder %s20, 0
      %s23 = sadd.s32 %s22, 1
      %s24 = scalar_select %p21, %s22, %s23
      %p27 = pneg %p21
      %p28 = scmp.eq.s32.totalorder %s12, 1
      %p29 = por %p27, %p28
      %p30 = scmp.ne.s32.totalorder %s22, %s25
      %p31 = scmp.eq.s32.totalorder %s12, 0
      %p32 = por %p30, %p31
      %p33 = scmp.ne.s32.totalorder %s22, %s25
      %p34 = scmp.eq.s32.totalorder %s17, 1
      %p35 = por %p33, %p34
      %p36 = scmp.ne.s32.totalorder %s25, %s26
      %p37 = scmp.eq.s32.totalorder %s17, 0
      %p38 = por %p36, %p37
      %p39 = scmp.ne.s32.totalorder %s25, %s26
      %p40 = scmp.eq.s32.totalorder %s18, 1
      %p41 = por %p39, %p40
      %p43 = scmp.ne.s32.totalorder %s26, %s42
      %p44 = scmp.eq.s32.totalorder %s18, 0
      %p45 = por %p43, %p44
      %s47 = sadd.s32 %s46, 1
      %p50 = scmp.eq.s32.totalorder %s12, 1
      %p51 = scmp.ne.s32.totalorder %s46, %s48
      %p52 = scmp.eq.s32.totalorder %s12, 0
      %p53 = por %p51, %p52
      %p54 = scmp.ne.s32.totalorder %s46, %s48
      %p55 = scmp.eq.s32.totalorder %s17, 1
      %p56 = por %p54, %p55
      %p57 = scmp.ne.s32.totalorder %s48, %s49
      %p58 = scmp.eq.s32.totalorder %s17, 0
      %p59 = por %p57, %p58
      %p60 = scmp.ne.s32.totalorder %s48, %s49
      %p61 = scmp.eq.s32.totalorder %s18, 1
      %p62 = por %p60, %p61
      %p64 = scmp.ne.s32.totalorder %s49, %s63
      %p65 = scmp.eq.s32.totalorder %s18, 0
      %p66 = por %p64, %p65
      %s68 = sadd.s32 %s67, 1
      %p71 = scmp.eq.s32.totalorder %s12, 1
      %p72 = scmp.ne.s32.totalorder %s67, %s69
      %p73 = scmp.eq.s32.totalorder %s12, 0
      %p74 = por %p72, %p73
      %p75 = scmp.ne.s32.totalorder %s67, %s69
      %p76 = scmp.eq.s32.totalorder %s17, 1
      %p77 = por %p75, %p76
      %p78 = scmp.ne.s32.totalorder %s69, %s70
      %p79 = scmp.eq.s32.totalorder %s17, 0
      %p80 = por %p78, %p79
      %p81 = scmp.ne.s32.totalorder %s69, %s70
      %p82 = scmp.eq.s32.totalorder %s18, 1
      %p83 = por %p81, %p82
      %p85 = scmp.ne.s32.totalorder %s70, %s84
      %p86 = scmp.eq.s32.totalorder %s18, 0
      %p87 = por %p85, %p86
      %s89 = sadd.s32 %s88, 1
      %p92 = scmp.eq.s32.totalorder %s12, 1
      %p93 = scmp.ne.s32.totalorder %s88, %s90
      %p94 = scmp.eq.s32.totalorder %s12, 0
      %p95 = por %p93, %p94
      %p96 = scmp.ne.s32.totalorder %s88, %s90
      %p97 = scmp.eq.s32.totalorder %s17, 1
      %p98 = por %p96, %p97
      %p99 = scmp.ne.s32.totalorder %s90, %s91
      %p100 = scmp.eq.s32.totalorder %s17, 0
      %p101 = por %p99, %p100
      %p102 = scmp.ne.s32.totalorder %s90, %s91
      %p103 = scmp.eq.s32.totalorder %s18, 1
      %p104 = por %p102, %p103
      %p106 = scmp.ne.s32.totalorder %s91, %s105
      %p107 = scmp.eq.s32.totalorder %s18, 0
      %p108 = por %p106, %p107
      %s110 = sadd.s32 %s109, 1
      %p113 = scmp.eq.s32.totalorder %s12, 1
      %p114 = scmp.ne.s32.totalorder %s109, %s111
      %p115 = scmp.eq.s32.totalorder %s12, 0
      %p116 = por %p114, %p115
      %p117 = scmp.ne.s32.totalorder %s109, %s111
      %p118 = scmp.eq.s32.totalorder %s17, 1
      %p119 = por %p117, %p118
      %p120 = scmp.ne.s32.totalorder %s111, %s112
      %p121 = scmp.eq.s32.totalorder %s17, 0
      %p122 = por %p120, %p121
      %p123 = scmp.ne.s32.totalorder %s111, %s112
      %p124 = scmp.eq.s32.totalorder %s18, 1
      %p125 = por %p123, %p124
      %p127 = scmp.ne.s32.totalorder %s112, %s126
      %p128 = scmp.eq.s32.totalorder %s18, 0
      %p129 = por %p127, %p128
      %s130 = ssub.s32 %s12, %s19
      %p131 = scmp.eq.s32.totalorder %s130, 0
      %s133 = sadd.s32 %s132, 1
      %s134 = scalar_select %p131, %s132, %s133
      %p137 = pneg %p131
      %p138 = scmp.eq.s32.totalorder %s12, 1
      %p139 = por %p137, %p138
      %p140 = scmp.ne.s32.totalorder %s132, %s135
      %p141 = scmp.eq.s32.totalorder %s12, 0
      %p142 = por %p140, %p141
      %p143 = scmp.ne.s32.totalorder %s132, %s135
      %p144 = scmp.eq.s32.totalorder %s17, 1
      %p145 = por %p143, %p144
      %p146 = scmp.ne.s32.totalorder %s135, %s136
      %p147 = scmp.eq.s32.totalorder %s17, 0
      %p148 = por %p146, %p147
      %p149 = scmp.ne.s32.totalorder %s135, %s136
      %p150 = scmp.eq.s32.totalorder %s18, 1
      %p151 = por %p149, %p150
      %p153 = scmp.ne.s32.totalorder %s136, %s152
      %p154 = scmp.eq.s32.totalorder %s18, 0
      %p155 = por %p153, %p154
      %p156 = scmp.le.s32.totalorder 1, %s12
      %p157 = scmp.lt.s32.totalorder %s12, 3
      %p158 = pnand %p156, %p157
      %p159 = pneg %p158
      // Predicated region
      $region9: #{fire_forward.1} parent=5 // pred_check
        _
      $region10: #{fire_forward.1} parent=5 // pred_check_branch
        %161 = sbr.rel (%p158) target = $region12
      $region11: #{fire_forward.1} parent=5 // pred_region
        %s162 = ssub.s32 %s12, 1
        // Predicated region
        $region13: #{fire_forward.1} parent=11 // pred_check
          %p163 = pneg %p59
        $region14: #{fire_forward.1} parent=11 // pred_check_branch
          %165 = sbr.rel (%p163) target = $region16
        $region15: #{fire_forward.1} parent=11 // pred_region
          _
        $region16: #{fire_forward.1} parent=11 // pred_fallthru
          _
        // Predicated region
        $region17: #{fire_forward.1} parent=11 // pred_check
          %p166 = pneg %p80
        $region18: #{fire_forward.1} parent=11 // pred_check_branch
          %168 = sbr.rel (%p166) target = $region20
        $region19: #{fire_forward.1} parent=11 // pred_region
          _
        $region20: #{fire_forward.1} parent=11 // pred_fallthru
          _
        // Predicated region
        $region21: #{fire_forward.1} parent=11 // pred_check
          %p169 = pneg %p101
        $region22: #{fire_forward.1} parent=11 // pred_check_branch
          %171 = sbr.rel (%p169) target = $region24
        $region23: #{fire_forward.1} parent=11 // pred_region
          %s173 = ssub.s32 24576, 24576
          %174 = vsyncadd [#allocation3], %s173
          %s175 = sshll.u32 [#allocation2], 4
          %s176 = int_to_ptr.vmem [resolvable:$true] %s175
          %181 = dma.hbm_to_vmem [thread:$0]  %s3, 24576, %s176, [#allocation3], 512, 512, 32
        $region24: #{fire_forward.1} parent=11 // pred_fallthru
          _
        // Predicated region
        $region25: #{fire_forward.1} parent=11 // pred_check
          %p182 = pneg %p122
        $region26: #{fire_forward.1} parent=11 // pred_check_branch
          %184 = sbr.rel (%p182) target = $region28
        $region27: #{fire_forward.1} parent=11 // pred_region
          _
        $region28: #{fire_forward.1} parent=11 // pred_fallthru
          _
      $region12: #{fire_forward.1} parent=5 // pred_fallthru
        _
      %p185 = scmp.lt.s32.totalorder %s12, 2
      // Predicated region
      $region29: #{fire_forward.1} parent=5 // pred_check
        %p186 = pneg %p185
      $region30: #{fire_forward.1} parent=5 // pred_check_branch
        %188 = sbr.rel (%p186) target = $region32
      $region31: #{fire_forward.1} parent=5 // pred_region
        // Predicated region
        $region33: #{fire_forward.1} parent=31 // pred_check
          %p189 = pneg %p32
        $region34: #{fire_forward.1} parent=31 // pred_check_branch
          %191 = sbr.rel (%p189) target = $region36
        $region35: #{fire_forward.1} parent=31 // pred_region
          %s192 = smul.u32 2, %s12
          %p193 = scmp.lt.s32.totalorder %s192, 3
          %s194 = scalar_select %p193, %s192, 3
          %s195 = smul.addr %s194, 8
          %s196 = scalar_lea.vmem %s0, %s195
          %s197 = smul.u32 2, %s12
        $region36: #{fire_forward.1} parent=31 // pred_fallthru
          _
      $region32: #{fire_forward.1} parent=5 // pred_fallthru
        _
      %p198 = scmp.le.s32.totalorder 1, %s12
      %p199 = scmp.lt.s32.totalorder %s12, 3
      %p200 = pnand %p198, %p199
      %p201 = pneg %p200
      // Predicated region
      $region37: #{fire_forward.1} parent=5 // pred_check
        _
      $region38: #{fire_forward.1} parent=5 // pred_check_branch
        %203 = sbr.rel (%p200) target = $region40
      $region39: #{fire_forward.1} parent=5 // pred_region
        %s204 = ssub.s32 %s12, 1
        // Predicated region
        $region41: #{fire_forward.1} parent=39 // pred_check
          %p205 = pneg %p101
        $region42: #{fire_forward.1} parent=39 // pred_check_branch
          %207 = sbr.rel (%p205) target = $region44
        $region43: #{fire_forward.1} parent=39 // pred_region
          %208 = dma.done [#allocation3], 24576
        $region44: #{fire_forward.1} parent=39 // pred_fallthru
          _
        %s209 = smul.u32 2, %s17
        %p210 = scmp.lt.s32.totalorder %s209, 3
        %s211 = scalar_select %p210, %s209, 3
        %s212 = smul.addr %s211, 8
        %s213 = scalar_lea.vmem %s0, %s212
        %p214 = pneg %p38
        %p215 = pneg %p35
        %p216 = pneg %p59
        %p217 = pneg %p56
        %p218 = pneg %p80
        %p219 = pneg %p77
        %p220 = pneg %p101
        %p221 = pneg %p98
        %p222 = pneg %p122
        %p223 = pneg %p119
        %p224 = pneg %p148
        %p225 = pneg %p145
        %s226 = smul.u32 2, %s17
        %p227 = scmp.lt.s32.totalorder %s226, 3
        %s228 = scalar_select %p227, %s226, 3
        %s229 = smul.addr %s228, 4
        %s230 = smul.addr %s229, 8
        %s231 = scalar_lea.vmem %s5, %s230
        %s232 = smul.u32 2, %s17
        %p233 = scmp.lt.s32.totalorder %s232, 3
        %s234 = scalar_select %p233, %s232, 3
        %s235 = smul.addr %s234, 8
        %s236 = scalar_lea.vmem %s0, %s235
        %s237 = smul.u32 2, %s17
        %s238 = smul.u32 2, %s17
        %p239 = scmp.lt.s32.totalorder %s238, 3
        %s240 = scalar_select %p239, %s238, 3
        %s241 = smul.addr %s240, 4
        %s242 = smul.addr %s241, 8
        %s243 = scalar_lea.vmem %s5, %s242
        %s244 = smul.u32 2, %s17
        %v245 = vld [vmem:[%s236] sm:$0xff]
        %v246 = vld [vmem:[%s236 + $0x8] sm:$0xff]
        %v247 = vld [vmem:[%s1] sm:$0xff]
        %v248 = vld [vmem:[%s1 + $0x8] sm:$0xff]
        %v249 = vld [vmem:[%s1 + $0x10] sm:$0xff]
        %v250 = vld [vmem:[%s1 + $0x18] sm:$0xff]
        %v251 = vld [vmem:[%s1 + $0x20] sm:$0xff]
        %v252 = vld [vmem:[%s1 + $0x28] sm:$0xff]
        %v253 = vld [vmem:[%s1 + $0x30] sm:$0xff]
        %v254 = vld [vmem:[%s1 + $0x38] sm:$0xff]
        %v255 = vld [vmem:[%s2] sm:$0x1]
        %v257 = vlaneseq
        %v258 = vshrl.u32 %v257, 7
        %v259 = vsub.s32 0, %v258
        %v260 = vrot.slane %v255, %v259
        %vm262 = vcmask 523264
        %v264 = vsel %vm262, %v245, 0
        %v267 = vsel %vm262, %v246, 0
        %269 = vmatprep.subr.mxu0 0.0
        %270 = vmatpush1.msra.mxu0 %v247
        %271 = vmatprep.subr.mxu0 0.0
        %272 = vmatpush1.msra.mxu0 %v248
        %273 = vmatprep.subr.mxu0 0.0
        %274 = vmatpush1.msra.mxu0 %v249
        %275 = vmatprep.subr.mxu0 0.0
        %276 = vmatpush1.msra.mxu0 %v250
        %277 = vmatprep.subr.mxu0 0.0
        %278 = vmatpush1.msra.mxu0 %v251
        %279 = vmatprep.subr.mxu0 0.0
        %280 = vmatpush1.msra.mxu0 %v252
        %281 = vmatprep.subr.mxu0 0.0
        %282 = vmatpush1.msra.mxu0 %v253
        %283 = vmatprep.subr.mxu0 0.0
        %284 = vmatpush1.msra.mxu0 %v254
        %285 = vmatprep.subr.mxu0 0.0
        %286 = vmatpush1.msra.mxu0 0.0
        %287 = vmatprep.subr.mxu0 0.0
        %288 = vmatpush1.msra.mxu0 0.0
        %289 = vmatprep.subr.mxu0 0.0
        %290 = vmatpush1.msra.mxu0 0.0
        %291 = vmatprep.subr.mxu0 0.0
        %292 = vmatpush1.msra.mxu0 0.0
        %293 = vmatprep.subr.mxu0 0.0
        %294 = vmatpush1.msra.mxu0 0.0
        %295 = vmatprep.subr.mxu0 0.0
        %296 = vmatpush1.msra.mxu0 0.0
        %297 = vmatprep.subr.mxu0 0.0
        %298 = vmatpush1.msra.mxu0 0.0
        %299 = vmatprep.subr.mxu0 0.0
        %300 = vmatpush1.msra.mxu0 0.0
        %301 = vmatprep.subr.mxu0 0.0
        %302 = vmatpush1.msra.mxu0 0.0
        %303 = vmatprep.subr.mxu0 0.0
        %304 = vmatpush1.msra.mxu0 0.0
        %305 = vmatprep.subr.mxu0 0.0
        %306 = vmatpush1.msra.mxu0 0.0
        %307 = vmatprep.subr.mxu0 0.0
        %308 = vmatpush1.msra.mxu0 0.0
        %309 = vmatprep.subr.mxu0 0.0
        %310 = vmatpush1.msra.mxu0 0.0
        %311 = vmatprep.subr.mxu0 0.0
        %312 = vmatpush1.msra.mxu0 0.0
        %313 = vmatprep.subr.mxu0 0.0
        %314 = vmatpush1.msra.mxu0 0.0
        %315 = vmatprep.subr.mxu0 0.0
        %316 = vmatpush1.msra.mxu0 0.0
        %317 = vmatprep.subr.mxu0 0.0
        %318 = vmatpush1.msra.mxu0 0.0
        %319 = vmatprep.subr.mxu0 0.0
        %320 = vmatpush1.msra.mxu0 0.0
        %321 = vmatprep.subr.mxu0 0.0
        %322 = vmatpush1.msra.mxu0 0.0
        %323 = vmatprep.subr.mxu0 0.0
        %324 = vmatpush1.msra.mxu0 0.0
        %325 = vmatprep.subr.mxu0 0.0
        %326 = vmatpush1.msra.mxu0 0.0
        %327 = vmatprep.subr.mxu0 0.0
        %328 = vmatpush1.msra.mxu0 0.0
        %329 = vmatprep.subr.mxu0 0.0
        %330 = vmatpush1.msra.mxu0 0.0
        %331 = vmatprep.subr.mxu0 0.0
        %332 = vmatpush1.msra.mxu0 0.0
        %333 = vmatprep.mubr.f32.mxu0 0.0
        %334 = vmatmul.mubr.f32.gmra.mrb[0].mxu0 %v264
        %v335 = vpop.f32.mrb[0].mxu0
        %v336 = vadd.f32 %v260, %v335
        %v337 = vpop.f32.mrb[0].mxu0
        %338 = vmatprep.mubr.f32.mxu0 0.0
        %339 = vmatmul.mubr.f32.gmra.mrb[0].mxu0 %v267
        %v340 = vpop.f32.mrb[0].mxu0
        %v341 = vadd.f32 %v260, %v340
        %v342 = vpop.f32.mrb[0].mxu0
        %343 = vdwg.mxu0
        %v344 = vmax.f32 %v336, 0.0
        %v345 = vmax.f32 %v341, 0.0
        %vm348 = vcmask 1040384
        %v349 = vrot.slane %v344, 7
        %v350 = vrot.slane %v345, 7
        %v351 = vsel %vm348, %v349, %v350
        %v354 = vsel %vm348, 0.0, %v349
        %vm355 = vcmask 1046528
        %v356 = vrot.slane %v344, 1
        %v357 = vrot.slane %v345, 1
        %v358 = vsel %vm355, %v356, %v357
        %v361 = vsel %vm355, %v357, 0.0
        %v362 = vld [vmem:[#allocation2] sm:$0xff]
        %v363 = vld [vmem:[#allocation2 + $0x8] sm:$0xff]
        %v364 = vld [vmem:[#allocation2 + $0x10] sm:$0xff]
        %v365 = vld [vmem:[#allocation2 + $0x18] sm:$0xff]
        %v366 = vld [vmem:[#allocation2 + $0x20] sm:$0xff]
        %v367 = vld [vmem:[#allocation2 + $0x28] sm:$0xff]
        %v368 = vld [vmem:[#allocation2 + $0x30] sm:$0xff]
        %v369 = vld [vmem:[#allocation2 + $0x38] sm:$0xff]
        %v370 = vld [vmem:[#allocation2 + $0x40] sm:$0xff]
        %v371 = vld [vmem:[#allocation2 + $0x48] sm:$0xff]
        %v372 = vld [vmem:[#allocation2 + $0x50] sm:$0xff]
        %v373 = vld [vmem:[#allocation2 + $0x58] sm:$0xff]
        %v374 = vld [vmem:[#allocation2 + $0x60] sm:$0xff]
        %v375 = vld [vmem:[#allocation2 + $0x68] sm:$0xff]
        %v376 = vld [vmem:[#allocation2 + $0x70] sm:$0xff]
        %v377 = vld [vmem:[#allocation2 + $0x78] sm:$0xff]
        %v378 = vld [vmem:[#allocation2 + $0x80] sm:$0xff]
        %v379 = vld [vmem:[#allocation2 + $0x88] sm:$0xff]
        %v380 = vld [vmem:[#allocation2 + $0x90] sm:$0xff]
        %v381 = vld [vmem:[#allocation2 + $0x98] sm:$0xff]
        %v382 = vld [vmem:[#allocation2 + $0xa0] sm:$0xff]
        %v383 = vld [vmem:[#allocation2 + $0xa8] sm:$0xff]
        %v384 = vld [vmem:[#allocation2 + $0xb0] sm:$0xff]
        %v385 = vld [vmem:[#allocation2 + $0xb8] sm:$0xff]
        %v386 = vld [vmem:[#allocation2 + $0xc0] sm:$0xff]
        %v387 = vld [vmem:[#allocation2 + $0xc8] sm:$0xff]
        %v388 = vld [vmem:[#allocation2 + $0xd0] sm:$0xff]
        %v389 = vld [vmem:[#allocation2 + $0xd8] sm:$0xff]
        %v390 = vld [vmem:[#allocation2 + $0xe0] sm:$0xff]
        %v391 = vld [vmem:[#allocation2 + $0xe8] sm:$0xff]
        %v392 = vld [vmem:[#allocation2 + $0xf0] sm:$0xff]
        %v393 = vld [vmem:[#allocation2 + $0xf8] sm:$0xff]
        %v394 = vld [vmem:[#allocation2 + $0x100] sm:$0xff]
        %v395 = vld [vmem:[#allocation2 + $0x108] sm:$0xff]
        %v396 = vld [vmem:[#allocation2 + $0x110] sm:$0xff]
        %v397 = vld [vmem:[#allocation2 + $0x118] sm:$0xff]
        %v398 = vld [vmem:[#allocation2 + $0x120] sm:$0xff]
        %v399 = vld [vmem:[#allocation2 + $0x128] sm:$0xff]
        %v400 = vld [vmem:[#allocation2 + $0x130] sm:$0xff]
        %v401 = vld [vmem:[#allocation2 + $0x138] sm:$0xff]
        %v402 = vld [vmem:[#allocation2 + $0x140] sm:$0xff]
        %v403 = vld [vmem:[#allocation2 + $0x148] sm:$0xff]
        %v404 = vld [vmem:[#allocation2 + $0x150] sm:$0xff]
        %v405 = vld [vmem:[#allocation2 + $0x158] sm:$0xff]
        %v406 = vld [vmem:[#allocation2 + $0x160] sm:$0xff]
        %v407 = vld [vmem:[#allocation2 + $0x168] sm:$0xff]
        %v408 = vld [vmem:[#allocation2 + $0x170] sm:$0xff]
        %v409 = vld [vmem:[#allocation2 + $0x178] sm:$0xff]
        %v410 = vld [vmem:[#allocation2 + $0x180] sm:$0xff]
        %v411 = vld [vmem:[#allocation2 + $0x188] sm:$0xff]
        %v412 = vld [vmem:[#allocation2 + $0x190] sm:$0xff]
        %v413 = vld [vmem:[#allocation2 + $0x198] sm:$0xff]
        %v414 = vld [vmem:[#allocation2 + $0x1a0] sm:$0xff]
        %v415 = vld [vmem:[#allocation2 + $0x1a8] sm:$0xff]
        %v416 = vld [vmem:[#allocation2 + $0x1b0] sm:$0xff]
        %v417 = vld [vmem:[#allocation2 + $0x1b8] sm:$0xff]
        %v418 = vld [vmem:[#allocation2 + $0x1c0] sm:$0xff]
        %v419 = vld [vmem:[#allocation2 + $0x1c8] sm:$0xff]
        %v420 = vld [vmem:[#allocation2 + $0x1d0] sm:$0xff]
        %v421 = vld [vmem:[#allocation2 + $0x1d8] sm:$0xff]
        %v422 = vld [vmem:[#allocation2 + $0x1e0] sm:$0xff]
        %v423 = vld [vmem:[#allocation2 + $0x1e8] sm:$0xff]
        %v424 = vld [vmem:[#allocation2 + $0x1f0] sm:$0xff]
        %v425 = vld [vmem:[#allocation2 + $0x1f8] sm:$0xff]
        %v426 = vld [vmem:[#allocation2 + $0x200] sm:$0xff]
        %v427 = vld [vmem:[#allocation2 + $0x208] sm:$0xff]
        %v428 = vld [vmem:[#allocation2 + $0x210] sm:$0xff]
        %v429 = vld [vmem:[#allocation2 + $0x218] sm:$0xff]
        %v430 = vld [vmem:[#allocation2 + $0x220] sm:$0xff]
        %v431 = vld [vmem:[#allocation2 + $0x228] sm:$0xff]
        %v432 = vld [vmem:[#allocation2 + $0x230] sm:$0xff]
        %v433 = vld [vmem:[#allocation2 + $0x238] sm:$0xff]
        %v434 = vld [vmem:[#allocation2 + $0x240] sm:$0xff]
        %v435 = vld [vmem:[#allocation2 + $0x248] sm:$0xff]
        %v436 = vld [vmem:[#allocation2 + $0x250] sm:$0xff]
        %v437 = vld [vmem:[#allocation2 + $0x258] sm:$0xff]
        %v438 = vld [vmem:[#allocation2 + $0x260] sm:$0xff]
        %v439 = vld [vmem:[#allocation2 + $0x268] sm:$0xff]
        %v440 = vld [vmem:[#allocation2 + $0x270] sm:$0xff]
        %v441 = vld [vmem:[#allocation2 + $0x278] sm:$0xff]
        %v442 = vld [vmem:[#allocation2 + $0x280] sm:$0xff]
        %v443 = vld [vmem:[#allocation2 + $0x288] sm:$0xff]
        %v444 = vld [vmem:[#allocation2 + $0x290] sm:$0xff]
        %v445 = vld [vmem:[#allocation2 + $0x298] sm:$0xff]
        %v446 = vld [vmem:[#allocation2 + $0x2a0] sm:$0xff]
        %v447 = vld [vmem:[#allocation2 + $0x2a8] sm:$0xff]
        %v448 = vld [vmem:[#allocation2 + $0x2b0] sm:$0xff]
        %v449 = vld [vmem:[#allocation2 + $0x2b8] sm:$0xff]
        %v450 = vld [vmem:[#allocation2 + $0x2c0] sm:$0xff]
        %v451 = vld [vmem:[#allocation2 + $0x2c8] sm:$0xff]
        %v452 = vld [vmem:[#allocation2 + $0x2d0] sm:$0xff]
        %v453 = vld [vmem:[#allocation2 + $0x2d8] sm:$0xff]
        %v454 = vld [vmem:[#allocation2 + $0x2e0] sm:$0xff]
        %v455 = vld [vmem:[#allocation2 + $0x2e8] sm:$0xff]
        %v456 = vld [vmem:[#allocation2 + $0x2f0] sm:$0xff]
        %v457 = vld [vmem:[#allocation2 + $0x2f8] sm:$0xff]
        %v458 = vld [vmem:[#allocation2 + $0x300] sm:$0xff]
        %v459 = vld [vmem:[#allocation2 + $0x308] sm:$0xff]
        %v460 = vld [vmem:[#allocation2 + $0x310] sm:$0xff]
        %v461 = vld [vmem:[#allocation2 + $0x318] sm:$0xff]
        %v462 = vld [vmem:[#allocation2 + $0x320] sm:$0xff]
        %v463 = vld [vmem:[#allocation2 + $0x328] sm:$0xff]
        %v464 = vld [vmem:[#allocation2 + $0x330] sm:$0xff]
        %v465 = vld [vmem:[#allocation2 + $0x338] sm:$0xff]
        %v466 = vld [vmem:[#allocation2 + $0x340] sm:$0xff]
        %v467 = vld [vmem:[#allocation2 + $0x348] sm:$0xff]
        %v468 = vld [vmem:[#allocation2 + $0x350] sm:$0xff]
        %v469 = vld [vmem:[#allocation2 + $0x358] sm:$0xff]
        %v470 = vld [vmem:[#allocation2 + $0x360] sm:$0xff]
        %v471 = vld [vmem:[#allocation2 + $0x368] sm:$0xff]
        %v472 = vld [vmem:[#allocation2 + $0x370] sm:$0xff]
        %v473 = vld [vmem:[#allocation2 + $0x378] sm:$0xff]
        %v474 = vld [vmem:[#allocation2 + $0x380] sm:$0xff]
        %v475 = vld [vmem:[#allocation2 + $0x388] sm:$0xff]
        %v476 = vld [vmem:[#allocation2 + $0x390] sm:$0xff]
        %v477 = vld [vmem:[#allocation2 + $0x398] sm:$0xff]
        %v478 = vld [vmem:[#allocation2 + $0x3a0] sm:$0xff]
        %v479 = vld [vmem:[#allocation2 + $0x3a8] sm:$0xff]
        %v480 = vld [vmem:[#allocation2 + $0x3b0] sm:$0xff]
        %v481 = vld [vmem:[#allocation2 + $0x3b8] sm:$0xff]
        %v482 = vld [vmem:[#allocation2 + $0x3c0] sm:$0xff]
        %v483 = vld [vmem:[#allocation2 + $0x3c8] sm:$0xff]
        %v484 = vld [vmem:[#allocation2 + $0x3d0] sm:$0xff]
        %v485 = vld [vmem:[#allocation2 + $0x3d8] sm:$0xff]
        %v486 = vld [vmem:[#allocation2 + $0x3e0] sm:$0xff]
        %v487 = vld [vmem:[#allocation2 + $0x3e8] sm:$0xff]
        %v488 = vld [vmem:[#allocation2 + $0x3f0] sm:$0xff]
        %v489 = vld [vmem:[#allocation2 + $0x3f8] sm:$0xff]
        %v490 = vld [vmem:[#allocation2 + $0x400] sm:$0xff]
        %v491 = vld [vmem:[#allocation2 + $0x408] sm:$0xff]
        %v492 = vld [vmem:[#allocation2 + $0x410] sm:$0xff]
        %v493 = vld [vmem:[#allocation2 + $0x418] sm:$0xff]
        %v494 = vld [vmem:[#allocation2 + $0x420] sm:$0xff]
        %v495 = vld [vmem:[#allocation2 + $0x428] sm:$0xff]
        %v496 = vld [vmem:[#allocation2 + $0x430] sm:$0xff]
        %v497 = vld [vmem:[#allocation2 + $0x438] sm:$0xff]
        %v498 = vld [vmem:[#allocation2 + $0x440] sm:$0xff]
        %v499 = vld [vmem:[#allocation2 + $0x448] sm:$0xff]
        %v500 = vld [vmem:[#allocation2 + $0x450] sm:$0xff]
        %v501 = vld [vmem:[#allocation2 + $0x458] sm:$0xff]
        %v502 = vld [vmem:[#allocation2 + $0x460] sm:$0xff]
        %v503 = vld [vmem:[#allocation2 + $0x468] sm:$0xff]
        %v504 = vld [vmem:[#allocation2 + $0x470] sm:$0xff]
        %v505 = vld [vmem:[#allocation2 + $0x478] sm:$0xff]
        %v506 = vld [vmem:[#allocation2 + $0x480] sm:$0xff]
        %v507 = vld [vmem:[#allocation2 + $0x488] sm:$0xff]
        %v508 = vld [vmem:[#allocation2 + $0x490] sm:$0xff]
        %v509 = vld [vmem:[#allocation2 + $0x498] sm:$0xff]
        %v510 = vld [vmem:[#allocation2 + $0x4a0] sm:$0xff]
        %v511 = vld [vmem:[#allocation2 + $0x4a8] sm:$0xff]
        %v512 = vld [vmem:[#allocation2 + $0x4b0] sm:$0xff]
        %v513 = vld [vmem:[#allocation2 + $0x4b8] sm:$0xff]
        %v514 = vld [vmem:[#allocation2 + $0x4c0] sm:$0xff]
        %v515 = vld [vmem:[#allocation2 + $0x4c8] sm:$0xff]
        %v516 = vld [vmem:[#allocation2 + $0x4d0] sm:$0xff]
        %v517 = vld [vmem:[#allocation2 + $0x4d8] sm:$0xff]
        %v518 = vld [vmem:[#allocation2 + $0x4e0] sm:$0xff]
        %v519 = vld [vmem:[#allocation2 + $0x4e8] sm:$0xff]
        %v520 = vld [vmem:[#allocation2 + $0x4f0] sm:$0xff]
        %v521 = vld [vmem:[#allocation2 + $0x4f8] sm:$0xff]
        %v522 = vld [vmem:[#allocation2 + $0x500] sm:$0xff]
        %v523 = vld [vmem:[#allocation2 + $0x508] sm:$0xff]
        %v524 = vld [vmem:[#allocation2 + $0x510] sm:$0xff]
        %v525 = vld [vmem:[#allocation2 + $0x518] sm:$0xff]
        %v526 = vld [vmem:[#allocation2 + $0x520] sm:$0xff]
        %v527 = vld [vmem:[#allocation2 + $0x528] sm:$0xff]
        %v528 = vld [vmem:[#allocation2 + $0x530] sm:$0xff]
        %v529 = vld [vmem:[#allocation2 + $0x538] sm:$0xff]
        %v530 = vld [vmem:[#allocation2 + $0x540] sm:$0xff]
        %v531 = vld [vmem:[#allocation2 + $0x548] sm:$0xff]
        %v532 = vld [vmem:[#allocation2 + $0x550] sm:$0xff]
        %v533 = vld [vmem:[#allocation2 + $0x558] sm:$0xff]
        %v534 = vld [vmem:[#allocation2 + $0x560] sm:$0xff]
        %v535 = vld [vmem:[#allocation2 + $0x568] sm:$0xff]
        %v536 = vld [vmem:[#allocation2 + $0x570] sm:$0xff]
        %v537 = vld [vmem:[#allocation2 + $0x578] sm:$0xff]
        %v538 = vld [vmem:[#allocation2 + $0x580] sm:$0xff]
        %v539 = vld [vmem:[#allocation2 + $0x588] sm:$0xff]
        %v540 = vld [vmem:[#allocation2 + $0x590] sm:$0xff]
        %v541 = vld [vmem:[#allocation2 + $0x598] sm:$0xff]
        %v542 = vld [vmem:[#allocation2 + $0x5a0] sm:$0xff]
        %v543 = vld [vmem:[#allocation2 + $0x5a8] sm:$0xff]
        %v544 = vld [vmem:[#allocation2 + $0x5b0] sm:$0xff]
        %v545 = vld [vmem:[#allocation2 + $0x5b8] sm:$0xff]
        %v546 = vld [vmem:[#allocation2 + $0x5c0] sm:$0xff]
        %v547 = vld [vmem:[#allocation2 + $0x5c8] sm:$0xff]
        %v548 = vld [vmem:[#allocation2 + $0x5d0] sm:$0xff]
        %v549 = vld [vmem:[#allocation2 + $0x5d8] sm:$0xff]
        %v550 = vld [vmem:[#allocation2 + $0x5e0] sm:$0xff]
        %v551 = vld [vmem:[#allocation2 + $0x5e8] sm:$0xff]
        %v552 = vld [vmem:[#allocation2 + $0x5f0] sm:$0xff]
        %v553 = vld [vmem:[#allocation2 + $0x5f8] sm:$0xff]
        %v554 = vld [vmem:[%s4] sm:$0xf]
        %v556 = vlaneseq
        %v557 = vshrl.u32 %v556, 7
        %v558 = vsub.s32 0, %v557
        %v559 = vrot.slane %v554, %v558
        %v560 = vlaneseq
        %v561 = vshrl.u32 %v560, 7
        %v562 = vsub.s32 1, %v561
        %v563 = vrot.slane %v554, %v562
        %v564 = vlaneseq
        %v565 = vshrl.u32 %v564, 7
        %v566 = vsub.s32 2, %v565
        %v567 = vrot.slane %v554, %v566
        %v568 = vlaneseq
        %v569 = vshrl.u32 %v568, 7
        %v570 = vsub.s32 3, %v569
        %v571 = vrot.slane %v554, %v570
        %576 = vmatprep.subr.mxu0 %v363
        %577 = vmatpush1.msra.mxu0 %v362
        %578 = vmatprep.subr.mxu0 %v367
        %579 = vmatpush1.msra.mxu0 %v366
        %580 = vmatprep.subr.mxu0 %v371
        %581 = vmatpush1.msra.mxu0 %v370
        %582 = vmatprep.subr.mxu0 %v375
        %583 = vmatpush1.msra.mxu0 %v374
        %584 = vmatprep.subr.mxu0 %v379
        %585 = vmatpush1.msra.mxu0 %v378
        %586 = vmatprep.subr.mxu0 %v383
        %587 = vmatpush1.msra.mxu0 %v382
        %588 = vmatprep.subr.mxu0 %v387
        %589 = vmatpush1.msra.mxu0 %v386
        %590 = vmatprep.subr.mxu0 %v391
        %591 = vmatpush1.msra.mxu0 %v390
        %592 = vmatprep.subr.mxu0 %v395
        %593 = vmatpush1.msra.mxu0 %v394
        %594 = vmatprep.subr.mxu0 %v399
        %595 = vmatpush1.msra.mxu0 %v398
        %596 = vmatprep.subr.mxu0 %v403
        %597 = vmatpush1.msra.mxu0 %v402
        %598 = vmatprep.subr.mxu0 %v407
        %599 = vmatpush1.msra.mxu0 %v406
        %600 = vmatprep.subr.mxu0 %v411
        %601 = vmatpush1.msra.mxu0 %v410
        %602 = vmatprep.subr.mxu0 %v415
        %603 = vmatpush1.msra.mxu0 %v414
        %604 = vmatprep.subr.mxu0 %v419
        %605 = vmatpush1.msra.mxu0 %v418
        %606 = vmatprep.subr.mxu0 %v423
        %607 = vmatpush1.msra.mxu0 %v422
        %608 = vmatprep.subr.mxu0 %v427
        %609 = vmatpush1.msra.mxu0 %v426
        %610 = vmatprep.subr.mxu0 %v431
        %611 = vmatpush1.msra.mxu0 %v430
        %612 = vmatprep.subr.mxu0 %v435
        %613 = vmatpush1.msra.mxu0 %v434
        %614 = vmatprep.subr.mxu0 %v439
        %615 = vmatpush1.msra.mxu0 %v438
        %616 = vmatprep.subr.mxu0 %v443
        %617 = vmatpush1.msra.mxu0 %v442
        %618 = vmatprep.subr.mxu0 %v447
        %619 = vmatpush1.msra.mxu0 %v446
        %620 = vmatprep.subr.mxu0 %v451
        %621 = vmatpush1.msra.mxu0 %v450
        %622 = vmatprep.subr.mxu0 %v455
        %623 = vmatpush1.msra.mxu0 %v454
        %624 = vmatprep.subr.mxu0 %v459
        %625 = vmatpush1.msra.mxu0 %v458
        %626 = vmatprep.subr.mxu0 %v463
        %627 = vmatpush1.msra.mxu0 %v462
        %628 = vmatprep.subr.mxu0 %v467
        %629 = vmatpush1.msra.mxu0 %v466
        %630 = vmatprep.subr.mxu0 %v471
        %631 = vmatpush1.msra.mxu0 %v470
        %632 = vmatprep.subr.mxu0 %v475
        %633 = vmatpush1.msra.mxu0 %v474
        %634 = vmatprep.subr.mxu0 %v479
        %635 = vmatpush1.msra.mxu0 %v478
        %636 = vmatprep.subr.mxu0 %v483
        %637 = vmatpush1.msra.mxu0 %v482
        %638 = vmatprep.subr.mxu0 %v487
        %639 = vmatpush1.msra.mxu0 %v486
        %640 = vmatprep.mubr.f32.mxu0 %v344
        %641 = vmatmul.mubr.f32.gmra.mrb[0].mxu0 %v354
        %v642 = vpop.f32.mrb[0].mxu0
        %v643 = vadd.f32 %v559, %v642
        %v644 = vpop.f32.mrb[0].mxu0
        %v645 = vadd.f32 %v563, %v644
        %646 = vmatprep.mubr.f32.mxu0 %v345
        %647 = vmatmul.mubr.f32.gmra.mrb[0].mxu0 %v351
        %v648 = vpop.f32.mrb[0].mxu0
        %v649 = vadd.f32 %v559, %v648
        %v650 = vpop.f32.mrb[0].mxu0
        %v651 = vadd.f32 %v563, %v650
        %652 = vdwg.mxu0
        %653 = vmatprep.subr.mxu0 %v491
        %654 = vmatpush1.msra.mxu0 %v490
        %655 = vmatprep.subr.mxu0 %v495
        %656 = vmatpush1.msra.mxu0 %v494
        %657 = vmatprep.subr.mxu0 %v499
        %658 = vmatpush1.msra.mxu0 %v498
        %659 = vmatprep.subr.mxu0 %v503
        %660 = vmatpush1.msra.mxu0 %v502
        %661 = vmatprep.subr.mxu0 %v507
        %662 = vmatpush1.msra.mxu0 %v506
        %663 = vmatprep.subr.mxu0 %v511
        %664 = vmatpush1.msra.mxu0 %v510
        %665 = vmatprep.subr.mxu0 %v515
        %666 = vmatpush1.msra.mxu0 %v514
        %667 = vmatprep.subr.mxu0 %v519
        %668 = vmatpush1.msra.mxu0 %v518
        %669 = vmatprep.subr.mxu0 %v523
        %670 = vmatpush1.msra.mxu0 %v522
        %671 = vmatprep.subr.mxu0 %v527
        %672 = vmatpush1.msra.mxu0 %v526
        %673 = vmatprep.subr.mxu0 %v531
        %674 = vmatpush1.msra.mxu0 %v530
        %675 = vmatprep.subr.mxu0 %v535
        %676 = vmatpush1.msra.mxu0 %v534
        %677 = vmatprep.subr.mxu0 %v539
        %678 = vmatpush1.msra.mxu0 %v538
        %679 = vmatprep.subr.mxu0 %v543
        %680 = vmatpush1.msra.mxu0 %v542
        %681 = vmatprep.subr.mxu0 %v547
        %682 = vmatpush1.msra.mxu0 %v546
        %683 = vmatprep.subr.mxu0 %v551
        %684 = vmatpush1.msra.mxu0 %v550
        %685 = vmatprep.subr.mxu0 0.0
        %686 = vmatpush1.msra.mxu0 0.0
        %687 = vmatprep.subr.mxu0 0.0
        %688 = vmatpush1.msra.mxu0 0.0
        %689 = vmatprep.subr.mxu0 0.0
        %690 = vmatpush1.msra.mxu0 0.0
        %691 = vmatprep.subr.mxu0 0.0
        %692 = vmatpush1.msra.mxu0 0.0
        %693 = vmatprep.subr.mxu0 0.0
        %694 = vmatpush1.msra.mxu0 0.0
        %695 = vmatprep.subr.mxu0 0.0
        %696 = vmatpush1.msra.mxu0 0.0
        %697 = vmatprep.subr.mxu0 0.0
        %698 = vmatpush1.msra.mxu0 0.0
        %699 = vmatprep.subr.mxu0 0.0
        %700 = vmatpush1.msra.mxu0 0.0
        %701 = vmatprep.subr.mxu0 0.0
        %702 = vmatpush1.msra.mxu0 0.0
        %703 = vmatprep.subr.mxu0 0.0
        %704 = vmatpush1.msra.mxu0 0.0
        %705 = vmatprep.subr.mxu0 0.0
        %706 = vmatpush1.msra.mxu0 0.0
        %707 = vmatprep.subr.mxu0 0.0
        %708 = vmatpush1.msra.mxu0 0.0
        %709 = vmatprep.subr.mxu0 0.0
        %710 = vmatpush1.msra.mxu0 0.0
        %711 = vmatprep.subr.mxu0 0.0
        %712 = vmatpush1.msra.mxu0 0.0
        %713 = vmatprep.subr.mxu0 0.0
        %714 = vmatpush1.msra.mxu0 0.0
        %715 = vmatprep.subr.mxu0 0.0
        %716 = vmatpush1.msra.mxu0 0.0
        %717 = vmatprep.mubr.f32.mxu0 0.0
        %718 = vmatmul.mubr.f32.gmra.mrb[0].mxu0 %v358
        %v719 = vpop.f32.mrb[0].mxu0
        %v720 = vadd.f32 %v643, %v719
        %v721 = vpop.f32.mrb[0].mxu0
        %v722 = vadd.f32 %v645, %v721
        %723 = vmatprep.mubr.f32.mxu0 0.0
        %724 = vmatmul.mubr.f32.gmra.mrb[0].mxu0 %v361
        %v725 = vpop.f32.mrb[0].mxu0
        %v726 = vadd.f32 %v649, %v725
        %v727 = vpop.f32.mrb[0].mxu0
        %v728 = vadd.f32 %v651, %v727
        %729 = vdwg.mxu0
        %730 = vmatprep.subr.mxu0 %v365
        %731 = vmatpush1.msra.mxu0 %v364
        %732 = vmatprep.subr.mxu0 %v369
        %733 = vmatpush1.msra.mxu0 %v368
        %734 = vmatprep.subr.mxu0 %v373
        %735 = vmatpush1.msra.mxu0 %v372
        %736 = vmatprep.subr.mxu0 %v377
        %737 = vmatpush1.msra.mxu0 %v376
        %738 = vmatprep.subr.mxu0 %v381
        %739 = vmatpush1.msra.mxu0 %v380
        %740 = vmatprep.subr.mxu0 %v385
        %741 = vmatpush1.msra.mxu0 %v384
        %742 = vmatprep.subr.mxu0 %v389
        %743 = vmatpush1.msra.mxu0 %v388
        %744 = vmatprep.subr.mxu0 %v393
        %745 = vmatpush1.msra.mxu0 %v392
        %746 = vmatprep.subr.mxu0 %v397
        %747 = vmatpush1.msra.mxu0 %v396
        %748 = vmatprep.subr.mxu0 %v401
        %749 = vmatpush1.msra.mxu0 %v400
        %750 = vmatprep.subr.mxu0 %v405
        %751 = vmatpush1.msra.mxu0 %v404
        %752 = vmatprep.subr.mxu0 %v409
        %753 = vmatpush1.msra.mxu0 %v408
        %754 = vmatprep.subr.mxu0 %v413
        %755 = vmatpush1.msra.mxu0 %v412
        %756 = vmatprep.subr.mxu0 %v417
        %757 = vmatpush1.msra.mxu0 %v416
        %758 = vmatprep.subr.mxu0 %v421
        %759 = vmatpush1.msra.mxu0 %v420
        %760 = vmatprep.subr.mxu0 %v425
        %761 = vmatpush1.msra.mxu0 %v424
        %762 = vmatprep.subr.mxu0 %v429
        %763 = vmatpush1.msra.mxu0 %v428
        %764 = vmatprep.subr.mxu0 %v433
        %765 = vmatpush1.msra.mxu0 %v432
        %766 = vmatprep.subr.mxu0 %v437
        %767 = vmatpush1.msra.mxu0 %v436
        %768 = vmatprep.subr.mxu0 %v441
        %769 = vmatpush1.msra.mxu0 %v440
        %770 = vmatprep.subr.mxu0 %v445
        %771 = vmatpush1.msra.mxu0 %v444
        %772 = vmatprep.subr.mxu0 %v449
        %773 = vmatpush1.msra.mxu0 %v448
        %774 = vmatprep.subr.mxu0 %v453
        %775 = vmatpush1.msra.mxu0 %v452
        %776 = vmatprep.subr.mxu0 %v457
        %777 = vmatpush1.msra.mxu0 %v456
        %778 = vmatprep.subr.mxu0 %v461
        %779 = vmatpush1.msra.mxu0 %v460
        %780 = vmatprep.subr.mxu0 %v465
        %781 = vmatpush1.msra.mxu0 %v464
        %782 = vmatprep.subr.mxu0 %v469
        %783 = vmatpush1.msra.mxu0 %v468
        %784 = vmatprep.subr.mxu0 %v473
        %785 = vmatpush1.msra.mxu0 %v472
        %786 = vmatprep.subr.mxu0 %v477
        %787 = vmatpush1.msra.mxu0 %v476
        %788 = vmatprep.subr.mxu0 %v481
        %789 = vmatpush1.msra.mxu0 %v480
        %790 = vmatprep.subr.mxu0 %v485
        %791 = vmatpush1.msra.mxu0 %v484
        %792 = vmatprep.subr.mxu0 %v489
        %793 = vmatpush1.msra.mxu0 %v488
        %794 = vmatprep.mubr.f32.mxu0 %v344
        %795 = vmatmul.mubr.f32.gmra.mrb[0].mxu0 %v354
        %v796 = vpop.f32.mrb[0].mxu0
        %v797 = vadd.f32 %v567, %v796
        %v798 = vpop.f32.mrb[0].mxu0
        %v799 = vadd.f32 %v571, %v798
        %800 = vmatprep.mubr.f32.mxu0 %v345
        %801 = vmatmul.mubr.f32.gmra.mrb[0].mxu0 %v351
        %v802 = vpop.f32.mrb[0].mxu0
        %v803 = vadd.f32 %v567, %v802
        %v804 = vpop.f32.mrb[0].mxu0
        %v805 = vadd.f32 %v571, %v804
        %806 = vdwg.mxu0
        %807 = vmatprep.subr.mxu0 %v493
        %808 = vmatpush1.msra.mxu0 %v492
        %809 = vmatprep.subr.mxu0 %v497
        %810 = vmatpush1.msra.mxu0 %v496
        %811 = vmatprep.subr.mxu0 %v501
        %812 = vmatpush1.msra.mxu0 %v500
        %813 = vmatprep.subr.mxu0 %v505
        %814 = vmatpush1.msra.mxu0 %v504
        %815 = vmatprep.subr.mxu0 %v509
        %816 = vmatpush1.msra.mxu0 %v508
        %817 = vmatprep.subr.mxu0 %v513
        %818 = vmatpush1.msra.mxu0 %v512
        %819 = vmatprep.subr.mxu0 %v517
        %820 = vmatpush1.msra.mxu0 %v516
        %821 = vmatprep.subr.mxu0 %v521
        %822 = vmatpush1.msra.mxu0 %v520
        %823 = vmatprep.subr.mxu0 %v525
        %824 = vmatpush1.msra.mxu0 %v524
        %825 = vmatprep.subr.mxu0 %v529
        %826 = vmatpush1.msra.mxu0 %v528
        %827 = vmatprep.subr.mxu0 %v533
        %828 = vmatpush1.msra.mxu0 %v532
        %829 = vmatprep.subr.mxu0 %v537
        %830 = vmatpush1.msra.mxu0 %v536
        %831 = vmatprep.subr.mxu0 %v541
        %832 = vmatpush1.msra.mxu0 %v540
        %833 = vmatprep.subr.mxu0 %v545
        %834 = vmatpush1.msra.mxu0 %v544
        %835 = vmatprep.subr.mxu0 %v549
        %836 = vmatpush1.msra.mxu0 %v548
        %837 = vmatprep.subr.mxu0 %v553
        %838 = vmatpush1.msra.mxu0 %v552
        %839 = vmatprep.subr.mxu0 0.0
        %840 = vmatpush1.msra.mxu0 0.0
        %841 = vmatprep.subr.mxu0 0.0
        %842 = vmatpush1.msra.mxu0 0.0
        %843 = vmatprep.subr.mxu0 0.0
        %844 = vmatpush1.msra.mxu0 0.0
        %845 = vmatprep.subr.mxu0 0.0
        %846 = vmatpush1.msra.mxu0 0.0
        %847 = vmatprep.subr.mxu0 0.0
        %848 = vmatpush1.msra.mxu0 0.0
        %849 = vmatprep.subr.mxu0 0.0
        %850 = vmatpush1.msra.mxu0 0.0
        %851 = vmatprep.subr.mxu0 0.0
        %852 = vmatpush1.msra.mxu0 0.0
        %853 = vmatprep.subr.mxu0 0.0
        %854 = vmatpush1.msra.mxu0 0.0
        %855 = vmatprep.subr.mxu0 0.0
        %856 = vmatpush1.msra.mxu0 0.0
        %857 = vmatprep.subr.mxu0 0.0
        %858 = vmatpush1.msra.mxu0 0.0
        %859 = vmatprep.subr.mxu0 0.0
        %860 = vmatpush1.msra.mxu0 0.0
        %861 = vmatprep.subr.mxu0 0.0
        %862 = vmatpush1.msra.mxu0 0.0
        %863 = vmatprep.subr.mxu0 0.0
        %864 = vmatpush1.msra.mxu0 0.0
        %865 = vmatprep.subr.mxu0 0.0
        %866 = vmatpush1.msra.mxu0 0.0
        %867 = vmatprep.subr.mxu0 0.0
        %868 = vmatpush1.msra.mxu0 0.0
        %869 = vmatprep.subr.mxu0 0.0
        %870 = vmatpush1.msra.mxu0 0.0
        %871 = vmatprep.mubr.f32.mxu0 0.0
        %872 = vmatmul.mubr.f32.gmra.mrb[0].mxu0 %v358
        %v873 = vpop.f32.mrb[0].mxu0
        %v874 = vadd.f32 %v797, %v873
        %v875 = vpop.f32.mrb[0].mxu0
        %v876 = vadd.f32 %v799, %v875
        %877 = vmatprep.mubr.f32.mxu0 0.0
        %878 = vmatmul.mubr.f32.gmra.mrb[0].mxu0 %v361
        %v879 = vpop.f32.mrb[0].mxu0
        %v880 = vadd.f32 %v803, %v879
        %v881 = vpop.f32.mrb[0].mxu0
        %v882 = vadd.f32 %v805, %v881
        %883 = vdwg.mxu0
        %v884 = vmax.f32 %v720, 0.0
        %v885 = vmax.f32 %v722, 0.0
        %v886 = vmax.f32 %v874, 0.0
        %v887 = vmax.f32 %v876, 0.0
        %v888 = vmax.f32 %v726, 0.0
        %v889 = vmax.f32 %v728, 0.0
        %v890 = vmax.f32 %v880, 0.0
        %v891 = vmax.f32 %v882, 0.0
        %892 = vst [vmem:[%s243] sm:$0xff] %v884
        %893 = vst [vmem:[%s243 + $0x8] sm:$0xff] %v885
        %894 = vst [vmem:[%s243 + $0x10] sm:$0xff] %v886
        %895 = vst [vmem:[%s243 + $0x18] sm:$0xff] %v887
        %896 = vst [vmem:[%s243 + $0x20] sm:$0xff] %v888
        %897 = vst [vmem:[%s243 + $0x28] sm:$0xff] %v889
        %898 = vst [vmem:[%s243 + $0x30] sm:$0xff] %v890
        %899 = vst [vmem:[%s243 + $0x38] sm:$0xff] %v891
        %s900 = smul.u32 2, %s17
        %p901 = scmp.lt.s32.totalorder %s900, 3
        %s902 = scalar_select %p901, %s900, 3
        %s903 = smul.addr %s902, 4
        %s904 = smul.addr %s903, 8
        %s905 = scalar_lea.vmem %s5, %s904
        // Predicated region
        $region45: #{fire_forward.1} parent=39 // pred_check
          %p906 = pneg %p145
        $region46: #{fire_forward.1} parent=39 // pred_check_branch
          %908 = sbr.rel (%p906) target = $region48
        $region47: #{fire_forward.1} parent=39 // pred_region
          %s909 = smul.u32 2, %s17
        $region48: #{fire_forward.1} parent=39 // pred_fallthru
          _
      $region40: #{fire_forward.1} parent=5 // pred_fallthru
        _
      %p910 = scmp.le.s32.totalorder 2, %s12
      // Predicated region
      $region49: #{fire_forward.1} parent=5 // pred_check
        %p911 = pneg %p910
      $region50: #{fire_forward.1} parent=5 // pred_check_branch
        %913 = sbr.rel (%p911) target = $region52
      $region51: #{fire_forward.1} parent=5 // pred_region
        %s914 = ssub.s32 %s12, 2
        // Predicated region
        $region53: #{fire_forward.1} parent=51 // pred_check
          %p915 = pneg %p151
        $region54: #{fire_forward.1} parent=51 // pred_check_branch
          %917 = sbr.rel (%p915) target = $region56
        $region55: #{fire_forward.1} parent=51 // pred_region
          %s918 = smul.u32 2, %s18
          %p919 = scmp.lt.s32.totalorder %s918, 3
          %s920 = scalar_select %p919, %s918, 3
          %s921 = smul.addr %s920, 4
          %s922 = smul.addr %s921, 8
          %s923 = scalar_lea.vmem %s5, %s922
        $region56: #{fire_forward.1} parent=51 // pred_fallthru
          _
      $region52: #{fire_forward.1} parent=5 // pred_fallthru
        _
    $region6: #{fire_forward.1} parent=1 // loop_footer
      %s16 = sadd.s32 1, %s12
    $region7: #{fire_forward.1} parent=1 // loop_footer_branch
      %11 = sbr.rel target = $region3
    $region8: #{fire_forward.1} parent=1 // loop_exit
      _
    %924 = vsyncpa [#allocation3], 1
    %s925 = scalar_lea.sflag [#allocation3], 1
    %926 = vsyncpa %s925, 1

</llo_original>
